<compile_context>
chip_gen: v7x
topology: tpu7x:2x2x1
jax: 0.10.0
libtpu: 0.0.40
codegen_flags: <defaults>
</compile_context>

<pallas_src>
import jax
import jax.numpy as jnp
from jax.experimental import pallas as pl
from jax.experimental.pallas import tpu as pltpu

HIDDEN_DIM = 32          # c.hidden_dim
COND_DIM = 128           # c.cond_aug_norm_dim (lane-aligned: slices hit 128 boundaries)
BATCH = 8


def _cond_aug_kernel(x_ref, w_ref, b_ref, eps_ref, sample_ref, mu_ref, logvar_ref):
    """x:(bm,H) f32, w:(H,4D) f32, b:(1,4D) f32, eps:(bm,D) f32 ->
       sample/mu/log_var: (bm,D) f32 each."""
    D = mu_ref.shape[-1]

    # MXU matmul, f32 operands / f32 accumulation. Bias add in f32.
    fc = jnp.dot(x_ref[...], w_ref[...],
                 preferred_element_type=jnp.float32) + b_ref[...]

    # GLU over the feature dim, computed directly from fc columns
    # (all slice boundaries are multiples of 128 lanes):
    #   mu      = fc[:,   :D ] * sigmoid(fc[:, 2D:3D])
    #   log_var = fc[:, D :2D] * sigmoid(fc[:, 3D:4D])
    mu = fc[:, :D] * jax.nn.sigmoid(fc[:, 2 * D:3 * D])
    log_var = fc[:, D:2 * D] * jax.nn.sigmoid(fc[:, 3 * D:])

    # Reparametrization trick (f32 elementwise; exp/sigmoid go to the EUP).
    std = jnp.exp(0.5 * log_var)

    # Direct lane-dense stores; no concatenate temporary.
    sample_ref[...] = eps_ref[...] * std + mu
    mu_ref[...] = mu
    logvar_ref[...] = log_var


def conditioning_augmentation_forward(text_embedding, w, b, eps, *, block_batch=1024):
    """text_embedding: (B, H) f32
       w:   (H, 4D) f32 (already transposed vs torch's (out,in))
       b:   (4D,)   f32
       eps: (B, D)  f32 standard-normal noise
       returns (sample, mu, log_var), each (B, D) f32
    """
    B, H = text_embedding.shape
    D4 = w.shape[1]
    D = D4 // 4
    b2d = b.reshape(1, D4).astype(jnp.float32)

    # Batch tile: multiple of 8 sublanes, capped at block_batch.  No padding of
    # the inputs: Pallas handles the ragged last block (writes past B dropped).
    bm = min(block_batch, max(8, ((B + 7) // 8) * 8))
    # v7x has 2 TensorCores per chip: if a large batch would land on a single
    # grid step, split it so both cores get work (only pays once per-block DMA
    # exceeds the ~0.35us step overhead, hence the B gate).
    if B >= 1024 and pl.cdiv(B, bm) == 1:
        bm = max(8, ((pl.cdiv(B, 2) + 7) // 8) * 8)
    grid = (pl.cdiv(B, bm),)

    cost = pl.CostEstimate(
        flops=2 * B * H * D4,
        transcendentals=3 * B * D,                              # 2x sigmoid + 1x exp
        bytes_accessed=(B * (H + D) + H * D4 + D4 + 3 * B * D) * 4,
    )

    out_spec = pl.BlockSpec((bm, D), lambda i: (i, 0))
    sample, mu, log_var = pl.pallas_call(
        _cond_aug_kernel,
        out_shape=(
            jax.ShapeDtypeStruct((B, D), jnp.float32),          # sample
            jax.ShapeDtypeStruct((B, D), jnp.float32),          # mu
            jax.ShapeDtypeStruct((B, D), jnp.float32),          # log_var
        ),
        grid=grid,
        in_specs=[
            pl.BlockSpec((bm, H), lambda i: (i, 0)),            # x: tiled over batch
            pl.BlockSpec((H, D4), lambda i: (0, 0)),            # w: VMEM-resident
            pl.BlockSpec((1, D4), lambda i: (0, 0)),            # b: VMEM-resident
            pl.BlockSpec((bm, D), lambda i: (i, 0)),            # eps: tiled over batch
        ],
        out_specs=(out_spec, out_spec, out_spec),
        compiler_params=pltpu.CompilerParams(
            dimension_semantics=("parallel",)),
        cost_estimate=cost,
    )(text_embedding, w, b2d, eps)

    return sample, mu, log_var


if __name__ == "__main__":
    key = jax.random.PRNGKey(0)
    k_x, k_w, k_b, k_eps = jax.random.split(key, 4)

    # Deterministic "parameters" (synthetic init, not a checkpoint load).
    x = jax.random.normal(k_x, (BATCH, HIDDEN_DIM), dtype=jnp.float32)
    w = jax.random.normal(k_w, (HIDDEN_DIM, 4 * COND_DIM), dtype=jnp.float32) * 0.05
    b = jax.random.normal(k_b, (4 * COND_DIM,), dtype=jnp.float32) * 0.01
    eps = jax.random.normal(k_eps, (BATCH, COND_DIM), dtype=jnp.float32)

    sample, mu, log_var = conditioning_augmentation_forward(x, w, b, eps)
    jax.block_until_ready((sample, mu, log_var))

    # Pure-JAX f32 reference check.
    fc_ref = jnp.dot(x, w, preferred_element_type=jnp.float32) + b
    glu_ref = fc_ref[:, :2 * COND_DIM] * jax.nn.sigmoid(fc_ref[:, 2 * COND_DIM:])
    mu_ref = glu_ref[:, :COND_DIM]
    lv_ref = glu_ref[:, COND_DIM:]
    samp_ref = eps * jnp.exp(0.5 * lv_ref) + mu_ref

    assert jnp.allclose(mu, mu_ref, atol=5e-3, rtol=5e-3), "mu mismatch"
    assert jnp.allclose(log_var, lv_ref, atol=5e-3, rtol=5e-3), "log_var mismatch"
    assert jnp.allclose(sample, samp_ref, atol=5e-3, rtol=5e-3), "sample mismatch"

    print("KERNEL_OK")
</pallas_src>

<mosaic_0001>
module attributes {stable_mosaic.version = 11 : i64} {
  func.func @_cond_aug_kernel(%arg0: i32, %arg1: memref<8x32xf32, #tpu.memory_space<vmem>>, %arg2: memref<32x512xf32, #tpu.memory_space<vmem>>, %arg3: memref<1x512xf32, #tpu.memory_space<vmem>>, %arg4: memref<8x128xf32, #tpu.memory_space<vmem>>, %arg5: memref<8x128xf32, #tpu.memory_space<vmem>>, %arg6: memref<8x128xf32, #tpu.memory_space<vmem>>, %arg7: memref<8x128xf32, #tpu.memory_space<vmem>>) attributes {dimension_semantics = [#tpu.dimension_semantics<parallel>], iteration_bounds = array<i64: 1>, scalar_prefetch = 0 : i64, scratch_operands = 0 : i64, tpu.core_type = #tpu.core_type<tc>, window_params = [{transform_indices = @transform_0, window_bounds = array<i64: 8, 32>}, {pipeline_mode = #tpu.pipeline_mode<synchronous>, transform_indices = @transform_1, window_bounds = array<i64: 32, 512>}, {pipeline_mode = #tpu.pipeline_mode<synchronous>, transform_indices = @transform_2, window_bounds = array<i64: 1, 512>}, {transform_indices = @transform_3, window_bounds = array<i64: 8, 128>}, {transform_indices = @transform_4, window_bounds = array<i64: 8, 128>}, {transform_indices = @transform_5, window_bounds = array<i64: 8, 128>}, {transform_indices = @transform_6, window_bounds = array<i64: 8, 128>}]} {
    %c0 = arith.constant 0 : index
    %c0_0 = arith.constant 0 : index
    %0 = vector.load %arg1[%c0, %c0_0] : memref<8x32xf32, #tpu.memory_space<vmem>>, vector<8x32xf32>
    %c0_1 = arith.constant 0 : index
    %c0_2 = arith.constant 0 : index
    %1 = vector.load %arg2[%c0_1, %c0_2] : memref<32x512xf32, #tpu.memory_space<vmem>>, vector<32x512xf32>
    %cst = arith.constant dense<0.000000e+00> : vector<8x512xf32>
    %2 = tpu.matmul %0, %1, %cst {dimension_numbers = #tpu.dot_dimension_numbers<[1], [0], [0], [1], [0, 0, 1, 1], [], []>} : vector<8x32xf32>, vector<32x512xf32>, vector<8x512xf32> -> vector<8x512xf32>
    %c0_3 = arith.constant 0 : index
    %c0_4 = arith.constant 0 : index
    %3 = vector.load %arg3[%c0_3, %c0_4] : memref<1x512xf32, #tpu.memory_space<vmem>>, vector<1x512xf32>
    %4 = vector.broadcast %3 : vector<1x512xf32> to vector<8x512xf32>
    %5 = arith.addf %2, %4 : vector<8x512xf32>
    %6 = vector.extract_strided_slice %5 {offsets = [0, 0], sizes = [8, 128], strides = [1, 1]} : vector<8x512xf32> to vector<8x128xf32>
    %7 = vector.extract_strided_slice %5 {offsets = [0, 256], sizes = [8, 128], strides = [1, 1]} : vector<8x512xf32> to vector<8x128xf32>
    %8 = arith.negf %7 : vector<8x128xf32>
    %9 = math.exp %8 : vector<8x128xf32>
    %cst_5 = arith.constant 1.000000e+00 : f32
    %10 = vector.broadcast %cst_5 : f32 to vector<8x128xf32>
    %11 = arith.addf %10, %9 : vector<8x128xf32>
    %12 = arith.divf %10, %11 : vector<8x128xf32>
    %13 = arith.mulf %6, %12 : vector<8x128xf32>
    %14 = vector.extract_strided_slice %5 {offsets = [0, 128], sizes = [8, 128], strides = [1, 1]} : vector<8x512xf32> to vector<8x128xf32>
    %15 = vector.extract_strided_slice %5 {offsets = [0, 384], sizes = [8, 128], strides = [1, 1]} : vector<8x512xf32> to vector<8x128xf32>
    %16 = arith.negf %15 : vector<8x128xf32>
    %17 = math.exp %16 : vector<8x128xf32>
    %cst_6 = arith.constant 1.000000e+00 : f32
    %18 = vector.broadcast %cst_6 : f32 to vector<8x128xf32>
    %19 = arith.addf %18, %17 : vector<8x128xf32>
    %20 = arith.divf %18, %19 : vector<8x128xf32>
    %21 = arith.mulf %14, %20 : vector<8x128xf32>
    %cst_7 = arith.constant 5.000000e-01 : f32
    %22 = vector.broadcast %cst_7 : f32 to vector<8x128xf32>
    %23 = arith.mulf %22, %21 : vector<8x128xf32>
    %24 = math.exp %23 : vector<8x128xf32>
    %c0_8 = arith.constant 0 : index
    %c0_9 = arith.constant 0 : index
    %25 = vector.load %arg4[%c0_8, %c0_9] : memref<8x128xf32, #tpu.memory_space<vmem>>, vector<8x128xf32>
    %26 = arith.mulf %25, %24 : vector<8x128xf32>
    %27 = arith.addf %26, %13 : vector<8x128xf32>
    %c0_10 = arith.constant 0 : index
    %c0_11 = arith.constant 0 : index
    %28 = vector.load %arg5[%c0_10, %c0_11] : memref<8x128xf32, #tpu.memory_space<vmem>>, vector<8x128xf32>
    tpu.vector_store %arg5[%c0_10, %c0_11], %27 {strides = array<i32>} : memref<8x128xf32, #tpu.memory_space<vmem>>, vector<8x128xf32>,
    %c0_12 = arith.constant 0 : index
    %c0_13 = arith.constant 0 : index
    %29 = vector.load %arg6[%c0_12, %c0_13] : memref<8x128xf32, #tpu.memory_space<vmem>>, vector<8x128xf32>
    tpu.vector_store %arg6[%c0_12, %c0_13], %13 {strides = array<i32>} : memref<8x128xf32, #tpu.memory_space<vmem>>, vector<8x128xf32>,
    %c0_14 = arith.constant 0 : index
    %c0_15 = arith.constant 0 : index
    %30 = vector.load %arg7[%c0_14, %c0_15] : memref<8x128xf32, #tpu.memory_space<vmem>>, vector<8x128xf32>
    tpu.vector_store %arg7[%c0_14, %c0_15], %21 {strides = array<i32>} : memref<8x128xf32, #tpu.memory_space<vmem>>, vector<8x128xf32>,
    return
  }
  func.func @transform_0(%arg0: i32) -> (i32, i32) {
    %c0_i32 = arith.constant 0 : i32
    %c0_i32_0 = arith.constant 0 : i32
    return %arg0, %c0_i32 : i32, i32
  }
  func.func @transform_1(%arg0: i32) -> (i32, i32) {
    %c0_i32 = arith.constant 0 : i32
    %c0_i32_0 = arith.constant 0 : i32
    %c0_i32_1 = arith.constant 0 : i32
    return %c0_i32, %c0_i32_0 : i32, i32
  }
  func.func @transform_2(%arg0: i32) -> (i32, i32) {
    %c0_i32 = arith.constant 0 : i32
    %c0_i32_0 = arith.constant 0 : i32
    %c0_i32_1 = arith.constant 0 : i32
    return %c0_i32, %c0_i32_0 : i32, i32
  }
  func.func @transform_3(%arg0: i32) -> (i32, i32) {
    %c0_i32 = arith.constant 0 : i32
    %c0_i32_0 = arith.constant 0 : i32
    return %arg0, %c0_i32 : i32, i32
  }
  func.func @transform_4(%arg0: i32) -> (i32, i32) {
    %c0_i32 = arith.constant 0 : i32
    %c0_i32_0 = arith.constant 0 : i32
    return %arg0, %c0_i32 : i32, i32
  }
  func.func @transform_5(%arg0: i32) -> (i32, i32) {
    %c0_i32 = arith.constant 0 : i32
    %c0_i32_0 = arith.constant 0 : i32
    return %arg0, %c0_i32 : i32, i32
  }
  func.func @transform_6(%arg0: i32) -> (i32, i32) {
    %c0_i32 = arith.constant 0 : i32
    %c0_i32_0 = arith.constant 0 : i32
    return %arg0, %c0_i32 : i32, i32
  }
}

</mosaic_0001>

<llo_original>
// kernel: tpu_custom_call.1
$region0: #{tpu_custom_call.1}
  #allocation0 [shape = 'u32[]', space=smem, size = 0x4, offset = 0x4, fixed_abs, tag = 'smem constant byte address 0x4 - core index']
  #allocation1 [shape = 'u32[144,128]{1,0:T(1,128)}', space=vmem, size = 0x12000, scoped, tag = 'internal scratch']
  %s0 = inlined_call_operand.hbm [shape: f32[8,32], index: 0, kind: input, shape index: {}]
  %s1 = inlined_call_operand.hbm [shape: f32[32,512], index: 1, kind: input, shape index: {}]
  %s2 = inlined_call_operand.hbm [shape: f32[1,512], index: 2, kind: input, shape index: {}]
  %s3 = inlined_call_operand.vmem [shape: f32[8,128], index: 3, kind: input, shape index: {}]
  %s4 = inlined_call_operand.hbm [shape: f32[8,128], index: 4, kind: output, shape index: {0}]
  %s5 = inlined_call_operand.hbm [shape: f32[8,128], index: 5, kind: output, shape index: {1}]
  %s6 = inlined_call_operand.hbm [shape: f32[8,128], index: 6, kind: output, shape index: {2}]
  %7 = xla_tuple %s4, %s5, %s6
  %s8 = sld [smem:[#allocation0]]
  $region54: #{tpu_custom_call.1} parent=0
    _
  %s10 = ssub.s32 1, %s8
  %s11 = scalar_select 0, %s10, %s8
  $region1: #{tpu_custom_call.1} parent=0
    #allocation2 [shape = 'u8[4096]{0}', space=vmem, size = 0x1000, scoped, tag = 'input window, operand 0, single buffered']
    #allocation3 [shape = 's32[1]{0}', space=sflag, size = 0x4, scoped, tag = 'scoped memory for tpu_custom_call.1']
    #allocation4 [shape = 's32[1]{0}', space=sflag, size = 0x4, scoped, tag = 'scoped memory for tpu_custom_call.1']
    #allocation5 [shape = 'u8[65536]{0}', space=vmem, size = 0x10000, scoped, tag = 'input window, operand 1, single buffered']
    #allocation6 [shape = 's32[1]{0}', space=sflag, size = 0x4, scoped, tag = 'scoped memory for tpu_custom_call.1']
    #allocation7 [shape = 'u8[2048]{0}', space=vmem, size = 0x800, scoped, tag = 'input window, operand 2, single buffered']
    #allocation8 [shape = 'u8[4096]{0}', space=vmem, size = 0x1000, scoped, tag = 'output window, operand 0, single buffered']
    #allocation9 [shape = 'u8[4096]{0}', space=vmem, size = 0x1000, scoped, tag = 'output window, operand 1, single buffered']
    #allocation10 [shape = 's32[1]{0}', space=sflag, size = 0x4, scoped, tag = 'scoped memory for tpu_custom_call.1']
    #allocation11 [shape = 'u8[4096]{0}', space=vmem, size = 0x1000, scoped, tag = 'output window, operand 2, single buffered']
    %12 = vsyncpa [#allocation3], 0
    %13 = vsyncpa [#allocation6], 0
    %14 = vsyncpa [#allocation4], 0
    %15 = vsyncpa [#allocation10], 0
    // Predicated region
    $region2: #{tpu_custom_call.1} parent=1 // pred_check
      _
    $region3: #{tpu_custom_call.1} parent=1 // pred_check_branch
      %17 = sbr.rel (0) target = $region5
    $region4: #{tpu_custom_call.1} parent=1 // pred_region
      %s19 = ssub.s32 128, 128
      %20 = vsyncadd [#allocation3], %s19
      %s22 = sshll.u32 [#allocation2], 4
      %s23 = int_to_ptr.vmem [resolvable:$true] %s22
      %25 = dma.hbm_to_vmem [thread:$0]  %s0, 128, %s23, [#allocation3]
    $region5: #{tpu_custom_call.1} parent=1 // pred_fallthru
      _
    // Predicated region
    $region6: #{tpu_custom_call.1} parent=1 // pred_check
      _
    $region7: #{tpu_custom_call.1} parent=1 // pred_check_branch
      %27 = sbr.rel (0) target = $region9
    $region8: #{tpu_custom_call.1} parent=1 // pred_region
      %s29 = ssub.s32 2048, 2048
      %30 = vsyncadd [#allocation6], %s29
      %s31 = sshll.u32 [#allocation5], 4
      %s32 = int_to_ptr.vmem [resolvable:$true] %s31
      %37 = dma.hbm_to_vmem [thread:$0]  %s1, 2048, %s32, [#allocation6], 512, 512, 32
    $region9: #{tpu_custom_call.1} parent=1 // pred_fallthru
      _
    // Predicated region
    $region10: #{tpu_custom_call.1} parent=1 // pred_check
      _
    $region11: #{tpu_custom_call.1} parent=1 // pred_check_branch
      %39 = sbr.rel (0) target = $region13
    $region12: #{tpu_custom_call.1} parent=1 // pred_region
      %s41 = ssub.s32 64, 64
      %42 = vsyncadd [#allocation6], %s41
      %s44 = sshll.u32 [#allocation7], 4
      %s45 = int_to_ptr.vmem [resolvable:$true] %s44
      %47 = dma.hbm_to_vmem [thread:$0]  %s2, 64, %s45, [#allocation6]
    $region13: #{tpu_custom_call.1} parent=1 // pred_fallthru
      _
    // Predicated region
    $region14: #{tpu_custom_call.1} parent=1 // pred_check
      _
    $region15: #{tpu_custom_call.1} parent=1 // pred_check_branch
      %49 = sbr.rel (0) target = $region17
    $region16: #{tpu_custom_call.1} parent=1 // pred_region
      _
    $region17: #{tpu_custom_call.1} parent=1 // pred_fallthru
      _
    // Predicated region
    $region18: #{tpu_custom_call.1} parent=1 // pred_check
      _
    $region19: #{tpu_custom_call.1} parent=1 // pred_check_branch
      %51 = sbr.rel (0) target = $region21
    $region20: #{tpu_custom_call.1} parent=1 // pred_region
      %52 = dma.done [#allocation3], 128
    $region21: #{tpu_custom_call.1} parent=1 // pred_fallthru
      _
    // Predicated region
    $region22: #{tpu_custom_call.1} parent=1 // pred_check
      _
    $region23: #{tpu_custom_call.1} parent=1 // pred_check_branch
      %54 = sbr.rel (0) target = $region25
    $region24: #{tpu_custom_call.1} parent=1 // pred_region
      %55 = dma.done [#allocation6], 2048
    $region25: #{tpu_custom_call.1} parent=1 // pred_fallthru
      _
    // Predicated region
    $region26: #{tpu_custom_call.1} parent=1 // pred_check
      _
    $region27: #{tpu_custom_call.1} parent=1 // pred_check_branch
      %57 = sbr.rel (0) target = $region29
    $region28: #{tpu_custom_call.1} parent=1 // pred_region
      %58 = dma.done [#allocation6], 64
    $region29: #{tpu_custom_call.1} parent=1 // pred_fallthru
      _
    %v59 = vld [vmem:[#allocation2] sm:$0xff]
    %v60 = vld [vmem:[#allocation5] sm:$0xff]
    %v61 = vld [vmem:[#allocation5 + $0x8] sm:$0xff]
    %v62 = vld [vmem:[#allocation5 + $0x10] sm:$0xff]
    %v63 = vld [vmem:[#allocation5 + $0x18] sm:$0xff]
    %v64 = vld [vmem:[#allocation5 + $0x20] sm:$0xff]
    %v65 = vld [vmem:[#allocation5 + $0x28] sm:$0xff]
    %v66 = vld [vmem:[#allocation5 + $0x30] sm:$0xff]
    %v67 = vld [vmem:[#allocation5 + $0x38] sm:$0xff]
    %v68 = vld [vmem:[#allocation5 + $0x40] sm:$0xff]
    %v69 = vld [vmem:[#allocation5 + $0x48] sm:$0xff]
    %v70 = vld [vmem:[#allocation5 + $0x50] sm:$0xff]
    %v71 = vld [vmem:[#allocation5 + $0x58] sm:$0xff]
    %v72 = vld [vmem:[#allocation5 + $0x60] sm:$0xff]
    %v73 = vld [vmem:[#allocation5 + $0x68] sm:$0xff]
    %v74 = vld [vmem:[#allocation5 + $0x70] sm:$0xff]
    %v75 = vld [vmem:[#allocation5 + $0x78] sm:$0xff]
    %v76 = vld [vmem:[#allocation7] sm:$0xf]
    %v78 = vlaneseq
    %v79 = vshrl.u32 %v78, 7
    %v80 = vsub.s32 0, %v79
    %v81 = vrot.slane %v76, %v80
    %v82 = vlaneseq
    %v83 = vshrl.u32 %v82, 7
    %v84 = vsub.s32 1, %v83
    %v85 = vrot.slane %v76, %v84
    %v86 = vlaneseq
    %v87 = vshrl.u32 %v86, 7
    %v88 = vsub.s32 2, %v87
    %v89 = vrot.slane %v76, %v88
    %v90 = vlaneseq
    %v91 = vshrl.u32 %v90, 7
    %v92 = vsub.s32 3, %v91
    %v93 = vrot.slane %v76, %v92
    %vm98 = vcmask 261120
    %v100 = vsel %vm98, %v59, 0
    %102 = vmatprep.subr.mxu0 %v61
    %103 = vmatpush1.msra.mxu0 %v60
    %104 = vmatprep.subr.mxu0 %v65
    %105 = vmatpush1.msra.mxu0 %v64
    %106 = vmatprep.subr.mxu0 %v69
    %107 = vmatpush1.msra.mxu0 %v68
    %108 = vmatprep.subr.mxu0 %v73
    %109 = vmatpush1.msra.mxu0 %v72
    %110 = vmatprep.subr.mxu0 0.0
    %111 = vmatpush1.msra.mxu0 0.0
    %112 = vmatprep.subr.mxu0 0.0
    %113 = vmatpush1.msra.mxu0 0.0
    %114 = vmatprep.subr.mxu0 0.0
    %115 = vmatpush1.msra.mxu0 0.0
    %116 = vmatprep.subr.mxu0 0.0
    %117 = vmatpush1.msra.mxu0 0.0
    %118 = vmatprep.subr.mxu0 0.0
    %119 = vmatpush1.msra.mxu0 0.0
    %120 = vmatprep.subr.mxu0 0.0
    %121 = vmatpush1.msra.mxu0 0.0
    %122 = vmatprep.subr.mxu0 0.0
    %123 = vmatpush1.msra.mxu0 0.0
    %124 = vmatprep.subr.mxu0 0.0
    %125 = vmatpush1.msra.mxu0 0.0
    %126 = vmatprep.subr.mxu0 0.0
    %127 = vmatpush1.msra.mxu0 0.0
    %128 = vmatprep.subr.mxu0 0.0
    %129 = vmatpush1.msra.mxu0 0.0
    %130 = vmatprep.subr.mxu0 0.0
    %131 = vmatpush1.msra.mxu0 0.0
    %132 = vmatprep.subr.mxu0 0.0
    %133 = vmatpush1.msra.mxu0 0.0
    %134 = vmatprep.subr.mxu0 0.0
    %135 = vmatpush1.msra.mxu0 0.0
    %136 = vmatprep.subr.mxu0 0.0
    %137 = vmatpush1.msra.mxu0 0.0
    %138 = vmatprep.subr.mxu0 0.0
    %139 = vmatpush1.msra.mxu0 0.0
    %140 = vmatprep.subr.mxu0 0.0
    %141 = vmatpush1.msra.mxu0 0.0
    %142 = vmatprep.subr.mxu0 0.0
    %143 = vmatpush1.msra.mxu0 0.0
    %144 = vmatprep.subr.mxu0 0.0
    %145 = vmatpush1.msra.mxu0 0.0
    %146 = vmatprep.subr.mxu0 0.0
    %147 = vmatpush1.msra.mxu0 0.0
    %148 = vmatprep.subr.mxu0 0.0
    %149 = vmatpush1.msra.mxu0 0.0
    %150 = vmatprep.subr.mxu0 0.0
    %151 = vmatpush1.msra.mxu0 0.0
    %152 = vmatprep.subr.mxu0 0.0
    %153 = vmatpush1.msra.mxu0 0.0
    %154 = vmatprep.subr.mxu0 0.0
    %155 = vmatpush1.msra.mxu0 0.0
    %156 = vmatprep.subr.mxu0 0.0
    %157 = vmatpush1.msra.mxu0 0.0
    %158 = vmatprep.subr.mxu0 0.0
    %159 = vmatpush1.msra.mxu0 0.0
    %160 = vmatprep.subr.mxu0 0.0
    %161 = vmatpush1.msra.mxu0 0.0
    %162 = vmatprep.subr.mxu0 0.0
    %163 = vmatpush1.msra.mxu0 0.0
    %164 = vmatprep.subr.mxu0 0.0
    %165 = vmatpush1.msra.mxu0 0.0
    %166 = vmatprep.mubr.f32.mxu0 0.0
    %167 = vmatmul.mubr.f32.gmra.mrb[0].mxu0 %v100
    %v168 = vpop.f32.mrb[0].mxu0
    %v169 = vadd.f32 %v81, %v168
    %v170 = vpop.f32.mrb[0].mxu0
    %v171 = vadd.f32 %v85, %v170
    %172 = vdwg.mxu0
    %173 = vmatprep.subr.mxu0 %v63
    %174 = vmatpush1.msra.mxu0 %v62
    %175 = vmatprep.subr.mxu0 %v67
    %176 = vmatpush1.msra.mxu0 %v66
    %177 = vmatprep.subr.mxu0 %v71
    %178 = vmatpush1.msra.mxu0 %v70
    %179 = vmatprep.subr.mxu0 %v75
    %180 = vmatpush1.msra.mxu0 %v74
    %181 = vmatprep.subr.mxu0 0.0
    %182 = vmatpush1.msra.mxu0 0.0
    %183 = vmatprep.subr.mxu0 0.0
    %184 = vmatpush1.msra.mxu0 0.0
    %185 = vmatprep.subr.mxu0 0.0
    %186 = vmatpush1.msra.mxu0 0.0
    %187 = vmatprep.subr.mxu0 0.0
    %188 = vmatpush1.msra.mxu0 0.0
    %189 = vmatprep.subr.mxu0 0.0
    %190 = vmatpush1.msra.mxu0 0.0
    %191 = vmatprep.subr.mxu0 0.0
    %192 = vmatpush1.msra.mxu0 0.0
    %193 = vmatprep.subr.mxu0 0.0
    %194 = vmatpush1.msra.mxu0 0.0
    %195 = vmatprep.subr.mxu0 0.0
    %196 = vmatpush1.msra.mxu0 0.0
    %197 = vmatprep.subr.mxu0 0.0
    %198 = vmatpush1.msra.mxu0 0.0
    %199 = vmatprep.subr.mxu0 0.0
    %200 = vmatpush1.msra.mxu0 0.0
    %201 = vmatprep.subr.mxu0 0.0
    %202 = vmatpush1.msra.mxu0 0.0
    %203 = vmatprep.subr.mxu0 0.0
    %204 = vmatpush1.msra.mxu0 0.0
    %205 = vmatprep.subr.mxu0 0.0
    %206 = vmatpush1.msra.mxu0 0.0
    %207 = vmatprep.subr.mxu0 0.0
    %208 = vmatpush1.msra.mxu0 0.0
    %209 = vmatprep.subr.mxu0 0.0
    %210 = vmatpush1.msra.mxu0 0.0
    %211 = vmatprep.subr.mxu0 0.0
    %212 = vmatpush1.msra.mxu0 0.0
    %213 = vmatprep.subr.mxu0 0.0
    %214 = vmatpush1.msra.mxu0 0.0
    %215 = vmatprep.subr.mxu0 0.0
    %216 = vmatpush1.msra.mxu0 0.0
    %217 = vmatprep.subr.mxu0 0.0
    %218 = vmatpush1.msra.mxu0 0.0
    %219 = vmatprep.subr.mxu0 0.0
    %220 = vmatpush1.msra.mxu0 0.0
    %221 = vmatprep.subr.mxu0 0.0
    %222 = vmatpush1.msra.mxu0 0.0
    %223 = vmatprep.subr.mxu0 0.0
    %224 = vmatpush1.msra.mxu0 0.0
    %225 = vmatprep.subr.mxu0 0.0
    %226 = vmatpush1.msra.mxu0 0.0
    %227 = vmatprep.subr.mxu0 0.0
    %228 = vmatpush1.msra.mxu0 0.0
    %229 = vmatprep.subr.mxu0 0.0
    %230 = vmatpush1.msra.mxu0 0.0
    %231 = vmatprep.subr.mxu0 0.0
    %232 = vmatpush1.msra.mxu0 0.0
    %233 = vmatprep.subr.mxu0 0.0
    %234 = vmatpush1.msra.mxu0 0.0
    %235 = vmatprep.subr.mxu0 0.0
    %236 = vmatpush1.msra.mxu0 0.0
    %237 = vmatprep.mubr.f32.mxu0 0.0
    %238 = vmatmul.mubr.f32.gmra.mrb[0].mxu0 %v100
    %v239 = vpop.f32.mrb[0].mxu0
    %v240 = vadd.f32 %v89, %v239
    %v241 = vpop.f32.mrb[0].mxu0
    %v242 = vadd.f32 %v93, %v241
    %243 = vdwg.mxu0
    %v244 = vxor.u32 %v240, 2147483648
    %v245 = vmul.f32 %v244, 1.442695
    %v246 = vpow.pop %v245
    %v247 = vadd.f32 %v246, 1.0
    %v248 = vrcp.pop %v247
    %v249 = vmul.f32 1.0, %v248
    %v250 = vmul.f32 %v169, %v249
    %v251 = vxor.u32 %v242, 2147483648
    %v252 = vmul.f32 %v251, 1.442695
    %v253 = vpow.pop %v252
    %v254 = vadd.f32 %v253, 1.0
    %v255 = vrcp.pop %v254
    %v256 = vmul.f32 1.0, %v255
    %v257 = vmul.f32 %v171, %v256
    %v258 = vmul.f32 %v257, 0.5
    %v259 = vmul.f32 %v258, 1.442695
    %v260 = vpow.pop %v259
    %v261 = vld [vmem:[%s3] sm:$0xff]
    %v262 = vmul.f32 %v261, %v260
    %v263 = vadd.f32 %v262, %v250
    %264 = vst [vmem:[#allocation8] sm:$0xff] %v263
    %265 = vst [vmem:[#allocation9] sm:$0xff] %v250
    %266 = vst [vmem:[#allocation11] sm:$0xff] %v257
    // Predicated region
    $region30: #{tpu_custom_call.1} parent=1 // pred_check
      _
    $region31: #{tpu_custom_call.1} parent=1 // pred_check_branch
      %268 = sbr.rel (0) target = $region33
    $region32: #{tpu_custom_call.1} parent=1 // pred_region
      %s270 = ssub.s32 128, 128
      %271 = vsyncadd [#allocation4], %s270
      %s273 = sshll.u32 [#allocation8], 4
      %s274 = int_to_ptr.vmem [resolvable:$true] %s273
      %276 = dma.vmem_to_hbm [thread:$0]  %s274, 128, %s4, [#allocation4]
    $region33: #{tpu_custom_call.1} parent=1 // pred_fallthru
      _
    // Predicated region
    $region34: #{tpu_custom_call.1} parent=1 // pred_check
      _
    $region35: #{tpu_custom_call.1} parent=1 // pred_check_branch
      %278 = sbr.rel (0) target = $region37
    $region36: #{tpu_custom_call.1} parent=1 // pred_region
      %s280 = ssub.s32 128, 128
      %281 = vsyncadd [#allocation10], %s280
      %s283 = sshll.u32 [#allocation9], 4
      %s284 = int_to_ptr.vmem [resolvable:$true] %s283
      %286 = dma.vmem_to_hbm [thread:$0]  %s284, 128, %s5, [#allocation10]
    $region37: #{tpu_custom_call.1} parent=1 // pred_fallthru
      _
    // Predicated region
    $region38: #{tpu_custom_call.1} parent=1 // pred_check
      _
    $region39: #{tpu_custom_call.1} parent=1 // pred_check_branch
      %288 = sbr.rel (0) target = $region41
    $region40: #{tpu_custom_call.1} parent=1 // pred_region
      %s290 = ssub.s32 128, 128
      %291 = vsyncadd [#allocation10], %s290
      %s293 = sshll.u32 [#allocation11], 4
      %s294 = int_to_ptr.vmem [resolvable:$true] %s293
      %296 = dma.vmem_to_hbm [thread:$0]  %s294, 128, %s6, [#allocation10]
    $region41: #{tpu_custom_call.1} parent=1 // pred_fallthru
      _
    // Predicated region
    $region42: #{tpu_custom_call.1} parent=1 // pred_check
      _
    $region43: #{tpu_custom_call.1} parent=1 // pred_check_branch
      %298 = sbr.rel (0) target = $region45
    $region44: #{tpu_custom_call.1} parent=1 // pred_region
      %299 = dma.done [#allocation4], 128
    $region45: #{tpu_custom_call.1} parent=1 // pred_fallthru
      _
    // Predicated region
    $region46: #{tpu_custom_call.1} parent=1 // pred_check
      _
    $region47: #{tpu_custom_call.1} parent=1 // pred_check_branch
      %301 = sbr.rel (0) target = $region49
    $region48: #{tpu_custom_call.1} parent=1 // pred_region
      %302 = dma.done [#allocation10], 128
    $region49: #{tpu_custom_call.1} parent=1 // pred_fallthru
      _
    // Predicated region
    $region50: #{tpu_custom_call.1} parent=1 // pred_check
      _
    $region51: #{tpu_custom_call.1} parent=1 // pred_check_branch
      %304 = sbr.rel (0) target = $region53
    $region52: #{tpu_custom_call.1} parent=1 // pred_region
      %305 = dma.done [#allocation10], 128
    $region53: #{tpu_custom_call.1} parent=1 // pred_fallthru
      _
    %306 = vsyncpa [#allocation3], 1
    %307 = vsyncpa [#allocation6], 1
    %308 = vsyncpa [#allocation4], 1
    %309 = vsyncpa [#allocation10], 1

</llo_original>
